<compile_context>
chip_gen: v7x
topology: tpu7x:2x2x1
jax: 0.10.0
libtpu: 0.0.40
codegen_flags: <defaults>
</compile_context>

<pallas_src>
import functools

import jax
import jax.numpy as jnp
from jax import lax
from jax.experimental import pallas as pl
from jax.experimental.pallas import tpu as pltpu


def _conv_bias_add_kernel(other_ref, x_ref, w_ref, b_ref, o_ref, *, stride, pad):
    # other_ref: (1,)            f32 SMEM  -- the `+ other` scalar
    # x_ref    : (H, W)          f32 VMEM  -- single-image, single-channel input
    # w_ref    : (Cout, KH, KW)  f32 VMEM  -- conv weight (Cin squeezed)
    # b_ref    : (Cout, 1, 1)    f32 VMEM  -- conv bias
    # o_ref    : (Cout, OH, OW)  f32 VMEM  -- conv(x) + bias + other, channel-major
    H, W = x_ref.shape
    _, KH, KW = w_ref.shape
    _, OH, OW = o_ref.shape

    x = x_ref[...]

    # 0/1 selection matrices built from 2-D iota.  The conv's zero-padding is folded in:
    # out-of-range source rows/cols select nothing and therefore contribute 0.
    #   R_kh[oh, h] = 1  iff  h == stride*oh + kh - pad         (OH, H)
    #   C_kw[w, ow] = 1  iff  w == stride*ow + kw - pad         (W, OW)
    oh_i = lax.broadcasted_iota(jnp.int32, (OH, H), 0)
    h_i = lax.broadcasted_iota(jnp.int32, (OH, H), 1)
    w_i = lax.broadcasted_iota(jnp.int32, (W, OW), 0)
    ow_i = lax.broadcasted_iota(jnp.int32, (W, OW), 1)
    Rs = [jnp.where(h_i == stride * oh_i + (kh - pad), 1.0, 0.0) for kh in range(KH)]
    Cs = [jnp.where(w_i == stride * ow_i + (kw - pad), 1.0, 0.0) for kw in range(KW)]

    # Accumulator initialized from (bias + other) broadcast (perf review item).
    acc = jnp.broadcast_to(b_ref[...] + other_ref[0], o_ref.shape)

    for kh in range(KH):
        # Gather the stride-strided (zero-padded) input rows for this kernel row.
        rows = jnp.dot(Rs[kh], x, preferred_element_type=jnp.float32)          # (OH, W)
        for kw in range(KW):
            patch = jnp.dot(rows, Cs[kw], preferred_element_type=jnp.float32)  # (OH, OW)
            # (Cout,1,1) * (1,OH,OW) -> (Cout,OH,OW): per-channel tap weight broadcast.
            acc = acc + w_ref[:, kh:kh + 1, kw:kw + 1] * patch[None, :, :]

    o_ref[...] = acc


@jax.jit
def model_forward(x, weight, bias, other=1.0):
    """x: (1, 1, H, W) f32 NCHW; weight: (Cout, 1, KH, KW); bias: (Cout,); other: scalar."""
    N, Cin, H, W = x.shape
    Cout, Cin_w, KH, KW = weight.shape
    stride, pad = 2, 2
    OH = (H + 2 * pad - KH) // stride + 1
    OW = (W + 2 * pad - KW) // stride + 1

    assert N == 1 and Cin == 1 and Cin_w == 1, "single-image, single-channel path"
    # TODO(synk): batched N>1 / Cin>1 path: grid over N with
    #             dimension_semantics=("parallel",) (2 TCs on v7x), lane-dense output
    #             tiles (M in multiples of 128, Cout padded 7->8), and M-tiles of
    #             2048-8192 lanes so buffers fit v7x's 32 MiB scoped / 64 MiB VMEM.

    # Metadata-only reshapes (drop/add unit dims); no pad/transpose fusions on the host.
    x2d = x.reshape(H, W).astype(jnp.float32)
    w3 = weight.reshape(Cout, KH, KW).astype(jnp.float32)
    b3 = bias.reshape(Cout, 1, 1).astype(jnp.float32)
    other_s = jnp.asarray(other, jnp.float32).reshape(1)
    # TODO(synk): a tensor-shaped `other` (N, Cout, OH, OW) would be passed as an extra
    #             VMEM operand and added in-kernel instead of the SMEM scalar.

    out3 = pl.pallas_call(
        functools.partial(_conv_bias_add_kernel, stride=stride, pad=pad),
        out_shape=jax.ShapeDtypeStruct((Cout, OH, OW), jnp.float32),
        in_specs=[
            pl.BlockSpec(memory_space=pltpu.MemorySpace.SMEM),   # other (1,)
            pl.BlockSpec(memory_space=pltpu.MemorySpace.VMEM),   # x (H, W)
            pl.BlockSpec(memory_space=pltpu.MemorySpace.VMEM),   # weight (Cout, KH, KW)
            pl.BlockSpec(memory_space=pltpu.MemorySpace.VMEM),   # bias (Cout, 1, 1)
        ],
        out_specs=pl.BlockSpec(memory_space=pltpu.MemorySpace.VMEM),
    )(other_s, x2d, w3, b3)

    # Channel-major already; for N == 1 this is a pure metadata reshape (no transpose).
    return out3.reshape(N, Cout, OH, OW)


if __name__ == "__main__":
    key = jax.random.PRNGKey(0)
    k1, k2, k3 = jax.random.split(key, 3)

    # Deterministic parameter init (Conv2d(1, 7, 2, stride=2, padding=2) shapes).
    weight = jax.random.normal(k1, (7, 1, 2, 2), jnp.float32) * 0.1
    bias = jax.random.normal(k2, (7,), jnp.float32) * 0.1

    # Input consistent with the module's x1 = torch.randn(1, 1, 7, 7).
    x = jax.random.normal(k3, (1, 1, 7, 7), jnp.float32)

    conv_ref = lax.conv_general_dilated(
        x, weight, window_strides=(2, 2), padding=((2, 2), (2, 2)),
        dimension_numbers=("NCHW", "OIHW", "NCHW"),
    ) + bias[None, :, None, None]

    # default other = 1
    out = jax.block_until_ready(model_forward(x, weight, bias, 1.0))
    assert out.shape == (1, 7, 5, 5), out.shape
    ref = conv_ref + 1.0
    assert jnp.allclose(out, ref, atol=1e-4, rtol=1e-4), float(jnp.max(jnp.abs(out - ref)))

    # non-default `other` is honored (folded in-kernel via the SMEM scalar)
    out2 = jax.block_until_ready(model_forward(x, weight, bias, 2.5))
    ref2 = conv_ref + 2.5
    assert jnp.allclose(out2, ref2, atol=1e-4, rtol=1e-4), float(jnp.max(jnp.abs(out2 - ref2)))

    print("KERNEL_OK")
</pallas_src>

<mosaic_0001>
module attributes {stable_mosaic.version = 11 : i64} {
  func.func @_conv_bias_add_kernel(%arg0: memref<1xf32, #tpu.memory_space<smem>>, %arg1: memref<7x7xf32, #tpu.memory_space<vmem>>, %arg2: memref<7x2x2xf32, #tpu.memory_space<vmem>>, %arg3: memref<7x1x1xf32, #tpu.memory_space<vmem>>, %arg4: memref<7x5x5xf32, #tpu.memory_space<vmem>>) attributes {dimension_semantics = [], scalar_prefetch = 0 : i64, scratch_operands = 0 : i64, tpu.core_type = #tpu.core_type<tc>} {
    %c0 = arith.constant 0 : index
    %c0_0 = arith.constant 0 : index
    %0 = vector.load %arg1[%c0, %c0_0] : memref<7x7xf32, #tpu.memory_space<vmem>>, vector<7x7xf32>
    %1 = tpu.iota {dimensions = array<i32: 0>} : vector<5x7xi32>
    %2 = tpu.iota {dimensions = array<i32: 1>} : vector<5x7xi32>
    %3 = tpu.iota {dimensions = array<i32: 0>} : vector<7x5xi32>
    %4 = tpu.iota {dimensions = array<i32: 1>} : vector<7x5xi32>
    %c2_i32 = arith.constant 2 : i32
    %5 = vector.broadcast %c2_i32 : i32 to vector<5x7xi32>
    %6 = arith.muli %5, %1 : vector<5x7xi32>
    %c-2_i32 = arith.constant -2 : i32
    %7 = vector.broadcast %c-2_i32 : i32 to vector<5x7xi32>
    %8 = arith.addi %6, %7 : vector<5x7xi32>
    %9 = arith.cmpi eq, %2, %8 : vector<5x7xi32>
    %cst = arith.constant 1.000000e+00 : f32
    %cst_1 = arith.constant 0.000000e+00 : f32
    %10 = vector.broadcast %cst : f32 to vector<5x7xf32>
    %11 = vector.broadcast %cst_1 : f32 to vector<5x7xf32>
    %12 = arith.select %9, %10, %11 : vector<5x7xi1>, vector<5x7xf32>
    %c2_i32_2 = arith.constant 2 : i32
    %13 = vector.broadcast %c2_i32_2 : i32 to vector<5x7xi32>
    %14 = arith.muli %13, %1 : vector<5x7xi32>
    %c-1_i32 = arith.constant -1 : i32
    %15 = vector.broadcast %c-1_i32 : i32 to vector<5x7xi32>
    %16 = arith.addi %14, %15 : vector<5x7xi32>
    %17 = arith.cmpi eq, %2, %16 : vector<5x7xi32>
    %cst_3 = arith.constant 1.000000e+00 : f32
    %cst_4 = arith.constant 0.000000e+00 : f32
    %18 = vector.broadcast %cst_3 : f32 to vector<5x7xf32>
    %19 = vector.broadcast %cst_4 : f32 to vector<5x7xf32>
    %20 = arith.select %17, %18, %19 : vector<5x7xi1>, vector<5x7xf32>
    %c2_i32_5 = arith.constant 2 : i32
    %21 = vector.broadcast %c2_i32_5 : i32 to vector<7x5xi32>
    %22 = arith.muli %21, %4 : vector<7x5xi32>
    %c-2_i32_6 = arith.constant -2 : i32
    %23 = vector.broadcast %c-2_i32_6 : i32 to vector<7x5xi32>
    %24 = arith.addi %22, %23 : vector<7x5xi32>
    %25 = arith.cmpi eq, %3, %24 : vector<7x5xi32>
    %cst_7 = arith.constant 1.000000e+00 : f32
    %cst_8 = arith.constant 0.000000e+00 : f32
    %26 = vector.broadcast %cst_7 : f32 to vector<7x5xf32>
    %27 = vector.broadcast %cst_8 : f32 to vector<7x5xf32>
    %28 = arith.select %25, %26, %27 : vector<7x5xi1>, vector<7x5xf32>
    %c2_i32_9 = arith.constant 2 : i32
    %29 = vector.broadcast %c2_i32_9 : i32 to vector<7x5xi32>
    %30 = arith.muli %29, %4 : vector<7x5xi32>
    %c-1_i32_10 = arith.constant -1 : i32
    %31 = vector.broadcast %c-1_i32_10 : i32 to vector<7x5xi32>
    %32 = arith.addi %30, %31 : vector<7x5xi32>
    %33 = arith.cmpi eq, %3, %32 : vector<7x5xi32>
    %cst_11 = arith.constant 1.000000e+00 : f32
    %cst_12 = arith.constant 0.000000e+00 : f32
    %34 = vector.broadcast %cst_11 : f32 to vector<7x5xf32>
    %35 = vector.broadcast %cst_12 : f32 to vector<7x5xf32>
    %36 = arith.select %33, %34, %35 : vector<7x5xi1>, vector<7x5xf32>
    %c0_13 = arith.constant 0 : index
    %c0_14 = arith.constant 0 : index
    %c0_15 = arith.constant 0 : index
    %37 = vector.load %arg3[%c0_13, %c0_14, %c0_15] : memref<7x1x1xf32, #tpu.memory_space<vmem>>, vector<7x1x1xf32>
    %c0_16 = arith.constant 0 : index
    %38 = memref.load %arg0[%c0_16] : memref<1xf32, #tpu.memory_space<smem>>
    %39 = vector.broadcast %38 : f32 to vector<7x1x1xf32>
    %40 = arith.addf %37, %39 : vector<7x1x1xf32>
    %41 = vector.shape_cast %40 : vector<7x1x1xf32> to vector<7x1x1xf32>
    %42 = vector.broadcast %41 : vector<7x1x1xf32> to vector<7x5x5xf32>
    %cst_17 = arith.constant dense<0.000000e+00> : vector<5x7xf32>
    %43 = tpu.matmul %12, %0, %cst_17 {dimension_numbers = #tpu.dot_dimension_numbers<[1], [0], [0], [1], [0, 0, 1, 1], [], []>} : vector<5x7xf32>, vector<7x7xf32>, vector<5x7xf32> -> vector<5x7xf32>
    %cst_18 = arith.constant dense<0.000000e+00> : vector<5x5xf32>
    %44 = tpu.matmul %43, %28, %cst_18 {dimension_numbers = #tpu.dot_dimension_numbers<[1], [0], [0], [1], [0, 0, 1, 1], [], []>} : vector<5x7xf32>, vector<7x5xf32>, vector<5x5xf32> -> vector<5x5xf32>
    %c0_19 = arith.constant 0 : index
    %c0_20 = arith.constant 0 : index
    %c0_21 = arith.constant 0 : index
    %45 = vector.load %arg2[%c0_19, %c0_20, %c0_21] : memref<7x2x2xf32, #tpu.memory_space<vmem>>, vector<7x1x1xf32>
    %46 = vector.shape_cast %44 : vector<5x5xf32> to vector<1x5x5xf32>
    %47 = vector.broadcast %45 : vector<7x1x1xf32> to vector<7x5x5xf32>
    %48 = vector.broadcast %46 : vector<1x5x5xf32> to vector<7x5x5xf32>
    %49 = arith.mulf %47, %48 : vector<7x5x5xf32>
    %50 = arith.addf %42, %49 : vector<7x5x5xf32>
    %cst_22 = arith.constant dense<0.000000e+00> : vector<5x5xf32>
    %51 = tpu.matmul %43, %36, %cst_22 {dimension_numbers = #tpu.dot_dimension_numbers<[1], [0], [0], [1], [0, 0, 1, 1], [], []>} : vector<5x7xf32>, vector<7x5xf32>, vector<5x5xf32> -> vector<5x5xf32>
    %c0_23 = arith.constant 0 : index
    %c0_24 = arith.constant 0 : index
    %c1 = arith.constant 1 : index
    %52 = vector.load %arg2[%c0_23, %c0_24, %c1] : memref<7x2x2xf32, #tpu.memory_space<vmem>>, vector<7x1x1xf32>
    %53 = vector.shape_cast %51 : vector<5x5xf32> to vector<1x5x5xf32>
    %54 = vector.broadcast %52 : vector<7x1x1xf32> to vector<7x5x5xf32>
    %55 = vector.broadcast %53 : vector<1x5x5xf32> to vector<7x5x5xf32>
    %56 = arith.mulf %54, %55 : vector<7x5x5xf32>
    %57 = arith.addf %50, %56 : vector<7x5x5xf32>
    %cst_25 = arith.constant dense<0.000000e+00> : vector<5x7xf32>
    %58 = tpu.matmul %20, %0, %cst_25 {dimension_numbers = #tpu.dot_dimension_numbers<[1], [0], [0], [1], [0, 0, 1, 1], [], []>} : vector<5x7xf32>, vector<7x7xf32>, vector<5x7xf32> -> vector<5x7xf32>
    %cst_26 = arith.constant dense<0.000000e+00> : vector<5x5xf32>
    %59 = tpu.matmul %58, %28, %cst_26 {dimension_numbers = #tpu.dot_dimension_numbers<[1], [0], [0], [1], [0, 0, 1, 1], [], []>} : vector<5x7xf32>, vector<7x5xf32>, vector<5x5xf32> -> vector<5x5xf32>
    %c0_27 = arith.constant 0 : index
    %c1_28 = arith.constant 1 : index
    %c0_29 = arith.constant 0 : index
    %60 = vector.load %arg2[%c0_27, %c1_28, %c0_29] : memref<7x2x2xf32, #tpu.memory_space<vmem>>, vector<7x1x1xf32>
    %61 = vector.shape_cast %59 : vector<5x5xf32> to vector<1x5x5xf32>
    %62 = vector.broadcast %60 : vector<7x1x1xf32> to vector<7x5x5xf32>
    %63 = vector.broadcast %61 : vector<1x5x5xf32> to vector<7x5x5xf32>
    %64 = arith.mulf %62, %63 : vector<7x5x5xf32>
    %65 = arith.addf %57, %64 : vector<7x5x5xf32>
    %cst_30 = arith.constant dense<0.000000e+00> : vector<5x5xf32>
    %66 = tpu.matmul %58, %36, %cst_30 {dimension_numbers = #tpu.dot_dimension_numbers<[1], [0], [0], [1], [0, 0, 1, 1], [], []>} : vector<5x7xf32>, vector<7x5xf32>, vector<5x5xf32> -> vector<5x5xf32>
    %c0_31 = arith.constant 0 : index
    %c1_32 = arith.constant 1 : index
    %c1_33 = arith.constant 1 : index
    %67 = vector.load %arg2[%c0_31, %c1_32, %c1_33] : memref<7x2x2xf32, #tpu.memory_space<vmem>>, vector<7x1x1xf32>
    %68 = vector.shape_cast %66 : vector<5x5xf32> to vector<1x5x5xf32>
    %69 = vector.broadcast %67 : vector<7x1x1xf32> to vector<7x5x5xf32>
    %70 = vector.broadcast %68 : vector<1x5x5xf32> to vector<7x5x5xf32>
    %71 = arith.mulf %69, %70 : vector<7x5x5xf32>
    %72 = arith.addf %65, %71 : vector<7x5x5xf32>
    %c0_34 = arith.constant 0 : index
    %c0_35 = arith.constant 0 : index
    %c0_36 = arith.constant 0 : index
    %73 = vector.load %arg4[%c0_34, %c0_35, %c0_36] : memref<7x5x5xf32, #tpu.memory_space<vmem>>, vector<7x5x5xf32>
    tpu.vector_store %arg4[%c0_34, %c0_35, %c0_36], %72 {strides = array<i32>} : memref<7x5x5xf32, #tpu.memory_space<vmem>>, vector<7x5x5xf32>,
    return
  }
}

</mosaic_0001>

<llo_original>
// kernel: model_forward.1
$region0: #{model_forward.1}
  #allocation0 [shape = 'u32[]', space=smem, size = 0x4, offset = 0x4, fixed_abs, tag = 'smem constant byte address 0x4 - core index']
  #allocation1 [shape = 'u32[144,128]{1,0:T(1,128)}', space=vmem, size = 0x12000, scoped, tag = 'internal scratch']
  #allocation2 [shape = 'f32[1]{0:T(128)S(6)}', space=smem, size = 0x200, scoped, tag = 'scoped memory for model_forward.1']
  %s0 = inlined_call_operand.<no memory space> [shape: f32[1], index: 0, kind: input, shape index: {}]
  %s1 = inlined_call_operand.vmem [shape: f32[7,7], index: 1, kind: input, shape index: {}]
  %s2 = inlined_call_operand.vmem [shape: f32[7,2,2], index: 2, kind: input, shape index: {}]
  %s3 = inlined_call_operand.vmem [shape: f32[7,1,1], index: 3, kind: input, shape index: {}]
  %s4 = inlined_call_operand.vmem [shape: f32[7,5,5], index: 4, kind: output, shape index: {}]
  %s5 = sld [smem:[#allocation0]]
  $region26: #{model_forward.1} parent=0
    _
  %s7 = ssub.s32 1, %s5
  %s8 = scalar_select 0, %s7, %s5
  %9 = sst [smem:[#allocation2]] %s0
  // Predicated region
  $region2: #{model_forward.1} parent=0 // pred_check
    _
  $region3: #{model_forward.1} parent=0 // pred_check_branch
    %11 = sbr.rel (0) target = $region5
  $region4: #{model_forward.1} parent=0 // pred_region
    _
  $region5: #{model_forward.1} parent=0 // pred_fallthru
    _
  // Predicated region
  $region6: #{model_forward.1} parent=0 // pred_check
    _
  $region7: #{model_forward.1} parent=0 // pred_check_branch
    %13 = sbr.rel (0) target = $region9
  $region8: #{model_forward.1} parent=0 // pred_region
    _
  $region9: #{model_forward.1} parent=0 // pred_fallthru
    _
  // Predicated region
  $region10: #{model_forward.1} parent=0 // pred_check
    _
  $region11: #{model_forward.1} parent=0 // pred_check_branch
    %15 = sbr.rel (0) target = $region13
  $region12: #{model_forward.1} parent=0 // pred_region
    _
  $region13: #{model_forward.1} parent=0 // pred_fallthru
    _
  // Predicated region
  $region14: #{model_forward.1} parent=0 // pred_check
    _
  $region15: #{model_forward.1} parent=0 // pred_check_branch
    %17 = sbr.rel (0) target = $region17
  $region16: #{model_forward.1} parent=0 // pred_region
    _
  $region17: #{model_forward.1} parent=0 // pred_fallthru
    _
  %v18 = vld [vmem:[%s1] sm:$0x7f]
  %v19 = vlaneseq
  %v20 = vshrl.u32 %v19, 7
  %v21 = vlaneseq
  %v22 = vand.u32 %v21, 127
  %v23 = vmul.u32 %v20, 2
  %v24 = vadd.s32 %v23, 4294967294
  %vm25 = vcmp.eq.s32.totalorder %v22, %v24
  %v26 = vsel %vm25, 1.0, 0.0
  %v27 = vadd.s32 %v23, 4294967295
  %vm28 = vcmp.eq.s32.totalorder %v22, %v27
  %v29 = vsel %vm28, 1.0, 0.0
  %v30 = vmul.u32 %v22, 2
  %v31 = vadd.s32 %v30, 4294967294
  %vm32 = vcmp.eq.s32.totalorder %v20, %v31
  %v33 = vsel %vm32, 1.0, 0.0
  %v34 = vadd.s32 %v30, 4294967295
  %vm35 = vcmp.eq.s32.totalorder %v20, %v34
  %v36 = vsel %vm35, 1.0, 0.0
  %v37 = vld [vmem:[%s3] sm:$0x1]
  %v38 = vld [vmem:[%s3 + $0x1] sm:$0x1]
  %v39 = vld [vmem:[%s3 + $0x2] sm:$0x1]
  %v40 = vld [vmem:[%s3 + $0x3] sm:$0x1]
  %v41 = vld [vmem:[%s3 + $0x4] sm:$0x1]
  %v42 = vld [vmem:[%s3 + $0x5] sm:$0x1]
  %v43 = vld [vmem:[%s3 + $0x6] sm:$0x1]
  %s44 = sld [smem:[#allocation2]]
  %v45 = vstv %s44
  %v46 = vadd.f32 %v37, %v45
  %v47 = vadd.f32 %v38, %v45
  %v48 = vadd.f32 %v39, %v45
  %v49 = vadd.f32 %v40, %v45
  %v50 = vadd.f32 %v41, %v45
  %v51 = vadd.f32 %v42, %v45
  %v52 = vadd.f32 %v43, %v45
  %v60 = vlaneseq
  %v61 = vshrl.u32 %v60, 7
  %v62 = vsub.s32 0, %v61
  %v63 = vrot.slane %v46, %v62
  %v64 = vlaneseq
  %v65 = vshrl.u32 %v64, 7
  %v66 = vsub.s32 0, %v65
  %v67 = vrot.slane %v47, %v66
  %v68 = vlaneseq
  %v69 = vshrl.u32 %v68, 7
  %v70 = vsub.s32 0, %v69
  %v71 = vrot.slane %v48, %v70
  %v72 = vlaneseq
  %v73 = vshrl.u32 %v72, 7
  %v74 = vsub.s32 0, %v73
  %v75 = vrot.slane %v49, %v74
  %v76 = vlaneseq
  %v77 = vshrl.u32 %v76, 7
  %v78 = vsub.s32 0, %v77
  %v79 = vrot.slane %v50, %v78
  %v80 = vlaneseq
  %v81 = vshrl.u32 %v80, 7
  %v82 = vsub.s32 0, %v81
  %v83 = vrot.slane %v51, %v82
  %v84 = vlaneseq
  %v85 = vshrl.u32 %v84, 7
  %v86 = vsub.s32 0, %v85
  %v87 = vrot.slane %v52, %v86
  %88 = vset.pattern.permute.xlu0 0
  %89 = vperm.xlu0 %88, %v63
  %v90 = vpop.permute.xlu0 %89
  %92 = vset.pattern.permute.xlu0 0
  %93 = vperm.xlu0 %92, %v67
  %v94 = vpop.permute.xlu0 %93
  %96 = vset.pattern.permute.xlu0 0
  %97 = vperm.xlu0 %96, %v71
  %v98 = vpop.permute.xlu0 %97
  %100 = vset.pattern.permute.xlu0 0
  %101 = vperm.xlu0 %100, %v75
  %v102 = vpop.permute.xlu0 %101
  %104 = vset.pattern.permute.xlu0 0
  %105 = vperm.xlu0 %104, %v79
  %v106 = vpop.permute.xlu0 %105
  %108 = vset.pattern.permute.xlu0 0
  %109 = vperm.xlu0 %108, %v83
  %v110 = vpop.permute.xlu0 %109
  %112 = vset.pattern.permute.xlu0 0
  %113 = vperm.xlu0 %112, %v87
  %v114 = vpop.permute.xlu0 %113
  %vm116 = vcmask 56320
  %v118 = vsel %vm116, %v26, 0
  %vm120 = vcmask 1046528
  %v122 = vsel %vm120, %v18, 0
  %124 = vmatprep.subr.mxu0 0.0
  %125 = vmatpush1.msra.mxu0 %v122
  %126 = vmatprep.subr.mxu0 0.0
  %127 = vmatpush1.msra.mxu0 0.0
  %128 = vmatprep.subr.mxu0 0.0
  %129 = vmatpush1.msra.mxu0 0.0
  %130 = vmatprep.subr.mxu0 0.0
  %131 = vmatpush1.msra.mxu0 0.0
  %132 = vmatprep.subr.mxu0 0.0
  %133 = vmatpush1.msra.mxu0 0.0
  %134 = vmatprep.subr.mxu0 0.0
  %135 = vmatpush1.msra.mxu0 0.0
  %136 = vmatprep.subr.mxu0 0.0
  %137 = vmatpush1.msra.mxu0 0.0
  %138 = vmatprep.subr.mxu0 0.0
  %139 = vmatpush1.msra.mxu0 0.0
  %140 = vmatprep.subr.mxu0 0.0
  %141 = vmatpush1.msra.mxu0 0.0
  %142 = vmatprep.subr.mxu0 0.0
  %143 = vmatpush1.msra.mxu0 0.0
  %144 = vmatprep.subr.mxu0 0.0
  %145 = vmatpush1.msra.mxu0 0.0
  %146 = vmatprep.subr.mxu0 0.0
  %147 = vmatpush1.msra.mxu0 0.0
  %148 = vmatprep.subr.mxu0 0.0
  %149 = vmatpush1.msra.mxu0 0.0
  %150 = vmatprep.subr.mxu0 0.0
  %151 = vmatpush1.msra.mxu0 0.0
  %152 = vmatprep.subr.mxu0 0.0
  %153 = vmatpush1.msra.mxu0 0.0
  %154 = vmatprep.subr.mxu0 0.0
  %155 = vmatpush1.msra.mxu0 0.0
  %156 = vmatprep.subr.mxu0 0.0
  %157 = vmatpush1.msra.mxu0 0.0
  %158 = vmatprep.subr.mxu0 0.0
  %159 = vmatpush1.msra.mxu0 0.0
  %160 = vmatprep.subr.mxu0 0.0
  %161 = vmatpush1.msra.mxu0 0.0
  %162 = vmatprep.subr.mxu0 0.0
  %163 = vmatpush1.msra.mxu0 0.0
  %164 = vmatprep.subr.mxu0 0.0
  %165 = vmatpush1.msra.mxu0 0.0
  %166 = vmatprep.subr.mxu0 0.0
  %167 = vmatpush1.msra.mxu0 0.0
  %168 = vmatprep.subr.mxu0 0.0
  %169 = vmatpush1.msra.mxu0 0.0
  %170 = vmatprep.subr.mxu0 0.0
  %171 = vmatpush1.msra.mxu0 0.0
  %172 = vmatprep.subr.mxu0 0.0
  %173 = vmatpush1.msra.mxu0 0.0
  %174 = vmatprep.subr.mxu0 0.0
  %175 = vmatpush1.msra.mxu0 0.0
  %176 = vmatprep.subr.mxu0 0.0
  %177 = vmatpush1.msra.mxu0 0.0
  %178 = vmatprep.subr.mxu0 0.0
  %179 = vmatpush1.msra.mxu0 0.0
  %180 = vmatprep.subr.mxu0 0.0
  %181 = vmatpush1.msra.mxu0 0.0
  %182 = vmatprep.subr.mxu0 0.0
  %183 = vmatpush1.msra.mxu0 0.0
  %184 = vmatprep.subr.mxu0 0.0
  %185 = vmatpush1.msra.mxu0 0.0
  %186 = vmatprep.subr.mxu0 0.0
  %187 = vmatpush1.msra.mxu0 0.0
  %188 = vmatprep.mubr.f32.mxu0 0.0
  %189 = vmatmul.mubr.f32.gmra.mrb[0].mxu0 %v118
  %v190 = vpop.f32.mrb[0].mxu0
  %v191 = vadd.f32 0.0, %v190
  %v192 = vpop.f32.mrb[0].mxu0
  %193 = vdwg.mxu0
  %v195 = vsel %vm116, %v191, 0
  %v198 = vsel %vm120, %v33, 0
  %200 = vmatprep.subr.mxu0 0.0
  %201 = vmatpush1.msra.mxu0 %v198
  %202 = vmatprep.subr.mxu0 0.0
  %203 = vmatpush1.msra.mxu0 0.0
  %204 = vmatprep.subr.mxu0 0.0
  %205 = vmatpush1.msra.mxu0 0.0
  %206 = vmatprep.subr.mxu0 0.0
  %207 = vmatpush1.msra.mxu0 0.0
  %208 = vmatprep.subr.mxu0 0.0
  %209 = vmatpush1.msra.mxu0 0.0
  %210 = vmatprep.subr.mxu0 0.0
  %211 = vmatpush1.msra.mxu0 0.0
  %212 = vmatprep.subr.mxu0 0.0
  %213 = vmatpush1.msra.mxu0 0.0
  %214 = vmatprep.subr.mxu0 0.0
  %215 = vmatpush1.msra.mxu0 0.0
  %216 = vmatprep.subr.mxu0 0.0
  %217 = vmatpush1.msra.mxu0 0.0
  %218 = vmatprep.subr.mxu0 0.0
  %219 = vmatpush1.msra.mxu0 0.0
  %220 = vmatprep.subr.mxu0 0.0
  %221 = vmatpush1.msra.mxu0 0.0
  %222 = vmatprep.subr.mxu0 0.0
  %223 = vmatpush1.msra.mxu0 0.0
  %224 = vmatprep.subr.mxu0 0.0
  %225 = vmatpush1.msra.mxu0 0.0
  %226 = vmatprep.subr.mxu0 0.0
  %227 = vmatpush1.msra.mxu0 0.0
  %228 = vmatprep.subr.mxu0 0.0
  %229 = vmatpush1.msra.mxu0 0.0
  %230 = vmatprep.subr.mxu0 0.0
  %231 = vmatpush1.msra.mxu0 0.0
  %232 = vmatprep.subr.mxu0 0.0
  %233 = vmatpush1.msra.mxu0 0.0
  %234 = vmatprep.subr.mxu0 0.0
  %235 = vmatpush1.msra.mxu0 0.0
  %236 = vmatprep.subr.mxu0 0.0
  %237 = vmatpush1.msra.mxu0 0.0
  %238 = vmatprep.subr.mxu0 0.0
  %239 = vmatpush1.msra.mxu0 0.0
  %240 = vmatprep.subr.mxu0 0.0
  %241 = vmatpush1.msra.mxu0 0.0
  %242 = vmatprep.subr.mxu0 0.0
  %243 = vmatpush1.msra.mxu0 0.0
  %244 = vmatprep.subr.mxu0 0.0
  %245 = vmatpush1.msra.mxu0 0.0
  %246 = vmatprep.subr.mxu0 0.0
  %247 = vmatpush1.msra.mxu0 0.0
  %248 = vmatprep.subr.mxu0 0.0
  %249 = vmatpush1.msra.mxu0 0.0
  %250 = vmatprep.subr.mxu0 0.0
  %251 = vmatpush1.msra.mxu0 0.0
  %252 = vmatprep.subr.mxu0 0.0
  %253 = vmatpush1.msra.mxu0 0.0
  %254 = vmatprep.subr.mxu0 0.0
  %255 = vmatpush1.msra.mxu0 0.0
  %256 = vmatprep.subr.mxu0 0.0
  %257 = vmatpush1.msra.mxu0 0.0
  %258 = vmatprep.subr.mxu0 0.0
  %259 = vmatpush1.msra.mxu0 0.0
  %260 = vmatprep.subr.mxu0 0.0
  %261 = vmatpush1.msra.mxu0 0.0
  %262 = vmatprep.subr.mxu0 0.0
  %263 = vmatpush1.msra.mxu0 0.0
  %264 = vmatprep.mubr.f32.mxu0 0.0
  %265 = vmatmul.mubr.f32.gmra.mrb[0].mxu0 %v195
  %v266 = vpop.f32.mrb[0].mxu0
  %v267 = vadd.f32 0.0, %v266
  %v268 = vpop.f32.mrb[0].mxu0
  %269 = vdwg.mxu0
  %v270 = vld [vmem:[%s2] sm:$0x1]
  %v271 = vld [vmem:[%s2 + $0x2] sm:$0x1]
  %v272 = vld [vmem:[%s2 + $0x4] sm:$0x1]
  %v273 = vld [vmem:[%s2 + $0x6] sm:$0x1]
  %v274 = vld [vmem:[%s2 + $0x8] sm:$0x1]
  %v275 = vld [vmem:[%s2 + $0xa] sm:$0x1]
  %v276 = vld [vmem:[%s2 + $0xc] sm:$0x1]
  %s278 = vtos %v270
  %v279 = vstv %s278
  %s282 = vtos %v271
  %v283 = vstv %s282
  %s286 = vtos %v272
  %v287 = vstv %s286
  %s290 = vtos %v273
  %v291 = vstv %s290
  %s294 = vtos %v274
  %v295 = vstv %s294
  %s298 = vtos %v275
  %v299 = vstv %s298
  %s302 = vtos %v276
  %v303 = vstv %s302
  %v305 = vmul.f32 %v279, %v267
  %v306 = vmul.f32 %v283, %v267
  %v307 = vmul.f32 %v287, %v267
  %v308 = vmul.f32 %v291, %v267
  %v309 = vmul.f32 %v295, %v267
  %v310 = vmul.f32 %v299, %v267
  %v311 = vmul.f32 %v303, %v267
  %v312 = vadd.f32 %v90, %v305
  %v313 = vadd.f32 %v94, %v306
  %v314 = vadd.f32 %v98, %v307
  %v315 = vadd.f32 %v102, %v308
  %v316 = vadd.f32 %v106, %v309
  %v317 = vadd.f32 %v110, %v310
  %v318 = vadd.f32 %v114, %v311
  %v320 = vsel %vm120, %v36, 0
  %322 = vmatprep.subr.mxu0 0.0
  %323 = vmatpush1.msra.mxu0 %v320
  %324 = vmatprep.subr.mxu0 0.0
  %325 = vmatpush1.msra.mxu0 0.0
  %326 = vmatprep.subr.mxu0 0.0
  %327 = vmatpush1.msra.mxu0 0.0
  %328 = vmatprep.subr.mxu0 0.0
  %329 = vmatpush1.msra.mxu0 0.0
  %330 = vmatprep.subr.mxu0 0.0
  %331 = vmatpush1.msra.mxu0 0.0
  %332 = vmatprep.subr.mxu0 0.0
  %333 = vmatpush1.msra.mxu0 0.0
  %334 = vmatprep.subr.mxu0 0.0
  %335 = vmatpush1.msra.mxu0 0.0
  %336 = vmatprep.subr.mxu0 0.0
  %337 = vmatpush1.msra.mxu0 0.0
  %338 = vmatprep.subr.mxu0 0.0
  %339 = vmatpush1.msra.mxu0 0.0
  %340 = vmatprep.subr.mxu0 0.0
  %341 = vmatpush1.msra.mxu0 0.0
  %342 = vmatprep.subr.mxu0 0.0
  %343 = vmatpush1.msra.mxu0 0.0
  %344 = vmatprep.subr.mxu0 0.0
  %345 = vmatpush1.msra.mxu0 0.0
  %346 = vmatprep.subr.mxu0 0.0
  %347 = vmatpush1.msra.mxu0 0.0
  %348 = vmatprep.subr.mxu0 0.0
  %349 = vmatpush1.msra.mxu0 0.0
  %350 = vmatprep.subr.mxu0 0.0
  %351 = vmatpush1.msra.mxu0 0.0
  %352 = vmatprep.subr.mxu0 0.0
  %353 = vmatpush1.msra.mxu0 0.0
  %354 = vmatprep.subr.mxu0 0.0
  %355 = vmatpush1.msra.mxu0 0.0
  %356 = vmatprep.subr.mxu0 0.0
  %357 = vmatpush1.msra.mxu0 0.0
  %358 = vmatprep.subr.mxu0 0.0
  %359 = vmatpush1.msra.mxu0 0.0
  %360 = vmatprep.subr.mxu0 0.0
  %361 = vmatpush1.msra.mxu0 0.0
  %362 = vmatprep.subr.mxu0 0.0
  %363 = vmatpush1.msra.mxu0 0.0
  %364 = vmatprep.subr.mxu0 0.0
  %365 = vmatpush1.msra.mxu0 0.0
  %366 = vmatprep.subr.mxu0 0.0
  %367 = vmatpush1.msra.mxu0 0.0
  %368 = vmatprep.subr.mxu0 0.0
  %369 = vmatpush1.msra.mxu0 0.0
  %370 = vmatprep.subr.mxu0 0.0
  %371 = vmatpush1.msra.mxu0 0.0
  %372 = vmatprep.subr.mxu0 0.0
  %373 = vmatpush1.msra.mxu0 0.0
  %374 = vmatprep.subr.mxu0 0.0
  %375 = vmatpush1.msra.mxu0 0.0
  %376 = vmatprep.subr.mxu0 0.0
  %377 = vmatpush1.msra.mxu0 0.0
  %378 = vmatprep.subr.mxu0 0.0
  %379 = vmatpush1.msra.mxu0 0.0
  %380 = vmatprep.subr.mxu0 0.0
  %381 = vmatpush1.msra.mxu0 0.0
  %382 = vmatprep.subr.mxu0 0.0
  %383 = vmatpush1.msra.mxu0 0.0
  %384 = vmatprep.subr.mxu0 0.0
  %385 = vmatpush1.msra.mxu0 0.0
  %386 = vmatprep.mubr.f32.mxu0 0.0
  %387 = vmatmul.mubr.f32.gmra.mrb[0].mxu0 %v195
  %v388 = vpop.f32.mrb[0].mxu0
  %v389 = vadd.f32 0.0, %v388
  %v390 = vpop.f32.mrb[0].mxu0
  %391 = vdwg.mxu0
  %392 = vrot.lane.b32.xlu0 %v270, 127
  %v393 = vpop.permute.xlu0 %392
  %394 = vrot.lane.b32.xlu0 %v271, 127
  %v395 = vpop.permute.xlu0 %394
  %396 = vrot.lane.b32.xlu0 %v272, 127
  %v397 = vpop.permute.xlu0 %396
  %398 = vrot.lane.b32.xlu0 %v273, 127
  %v399 = vpop.permute.xlu0 %398
  %400 = vrot.lane.b32.xlu0 %v274, 127
  %v401 = vpop.permute.xlu0 %400
  %402 = vrot.lane.b32.xlu0 %v275, 127
  %v403 = vpop.permute.xlu0 %402
  %404 = vrot.lane.b32.xlu0 %v276, 127
  %v405 = vpop.permute.xlu0 %404
  %s406 = vtos %v393
  %v407 = vstv %s406
  %s409 = vtos %v395
  %v410 = vstv %s409
  %s412 = vtos %v397
  %v413 = vstv %s412
  %s415 = vtos %v399
  %v416 = vstv %s415
  %s418 = vtos %v401
  %v419 = vstv %s418
  %s421 = vtos %v403
  %v422 = vstv %s421
  %s424 = vtos %v405
  %v425 = vstv %s424
  %v427 = vmul.f32 %v407, %v389
  %v428 = vmul.f32 %v410, %v389
  %v429 = vmul.f32 %v413, %v389
  %v430 = vmul.f32 %v416, %v389
  %v431 = vmul.f32 %v419, %v389
  %v432 = vmul.f32 %v422, %v389
  %v433 = vmul.f32 %v425, %v389
  %v434 = vadd.f32 %v312, %v427
  %v435 = vadd.f32 %v313, %v428
  %v436 = vadd.f32 %v314, %v429
  %v437 = vadd.f32 %v315, %v430
  %v438 = vadd.f32 %v316, %v431
  %v439 = vadd.f32 %v317, %v432
  %v440 = vadd.f32 %v318, %v433
  %v442 = vsel %vm116, %v29, 0
  %444 = vmatprep.subr.mxu0 0.0
  %445 = vmatpush1.msra.mxu0 %v122
  %446 = vmatprep.subr.mxu0 0.0
  %447 = vmatpush1.msra.mxu0 0.0
  %448 = vmatprep.subr.mxu0 0.0
  %449 = vmatpush1.msra.mxu0 0.0
  %450 = vmatprep.subr.mxu0 0.0
  %451 = vmatpush1.msra.mxu0 0.0
  %452 = vmatprep.subr.mxu0 0.0
  %453 = vmatpush1.msra.mxu0 0.0
  %454 = vmatprep.subr.mxu0 0.0
  %455 = vmatpush1.msra.mxu0 0.0
  %456 = vmatprep.subr.mxu0 0.0
  %457 = vmatpush1.msra.mxu0 0.0
  %458 = vmatprep.subr.mxu0 0.0
  %459 = vmatpush1.msra.mxu0 0.0
  %460 = vmatprep.subr.mxu0 0.0
  %461 = vmatpush1.msra.mxu0 0.0
  %462 = vmatprep.subr.mxu0 0.0
  %463 = vmatpush1.msra.mxu0 0.0
  %464 = vmatprep.subr.mxu0 0.0
  %465 = vmatpush1.msra.mxu0 0.0
  %466 = vmatprep.subr.mxu0 0.0
  %467 = vmatpush1.msra.mxu0 0.0
  %468 = vmatprep.subr.mxu0 0.0
  %469 = vmatpush1.msra.mxu0 0.0
  %470 = vmatprep.subr.mxu0 0.0
  %471 = vmatpush1.msra.mxu0 0.0
  %472 = vmatprep.subr.mxu0 0.0
  %473 = vmatpush1.msra.mxu0 0.0
  %474 = vmatprep.subr.mxu0 0.0
  %475 = vmatpush1.msra.mxu0 0.0
  %476 = vmatprep.subr.mxu0 0.0
  %477 = vmatpush1.msra.mxu0 0.0
  %478 = vmatprep.subr.mxu0 0.0
  %479 = vmatpush1.msra.mxu0 0.0
  %480 = vmatprep.subr.mxu0 0.0
  %481 = vmatpush1.msra.mxu0 0.0
  %482 = vmatprep.subr.mxu0 0.0
  %483 = vmatpush1.msra.mxu0 0.0
  %484 = vmatprep.subr.mxu0 0.0
  %485 = vmatpush1.msra.mxu0 0.0
  %486 = vmatprep.subr.mxu0 0.0
  %487 = vmatpush1.msra.mxu0 0.0
  %488 = vmatprep.subr.mxu0 0.0
  %489 = vmatpush1.msra.mxu0 0.0
  %490 = vmatprep.subr.mxu0 0.0
  %491 = vmatpush1.msra.mxu0 0.0
  %492 = vmatprep.subr.mxu0 0.0
  %493 = vmatpush1.msra.mxu0 0.0
  %494 = vmatprep.subr.mxu0 0.0
  %495 = vmatpush1.msra.mxu0 0.0
  %496 = vmatprep.subr.mxu0 0.0
  %497 = vmatpush1.msra.mxu0 0.0
  %498 = vmatprep.subr.mxu0 0.0
  %499 = vmatpush1.msra.mxu0 0.0
  %500 = vmatprep.subr.mxu0 0.0
  %501 = vmatpush1.msra.mxu0 0.0
  %502 = vmatprep.subr.mxu0 0.0
  %503 = vmatpush1.msra.mxu0 0.0
  %504 = vmatprep.subr.mxu0 0.0
  %505 = vmatpush1.msra.mxu0 0.0
  %506 = vmatprep.subr.mxu0 0.0
  %507 = vmatpush1.msra.mxu0 0.0
  %508 = vmatprep.mubr.f32.mxu0 0.0
  %509 = vmatmul.mubr.f32.gmra.mrb[0].mxu0 %v442
  %v510 = vpop.f32.mrb[0].mxu0
  %v511 = vadd.f32 0.0, %v510
  %v512 = vpop.f32.mrb[0].mxu0
  %513 = vdwg.mxu0
  %v515 = vsel %vm116, %v511, 0
  %517 = vmatprep.subr.mxu0 0.0
  %518 = vmatpush1.msra.mxu0 %v198
  %519 = vmatprep.subr.mxu0 0.0
  %520 = vmatpush1.msra.mxu0 0.0
  %521 = vmatprep.subr.mxu0 0.0
  %522 = vmatpush1.msra.mxu0 0.0
  %523 = vmatprep.subr.mxu0 0.0
  %524 = vmatpush1.msra.mxu0 0.0
  %525 = vmatprep.subr.mxu0 0.0
  %526 = vmatpush1.msra.mxu0 0.0
  %527 = vmatprep.subr.mxu0 0.0
  %528 = vmatpush1.msra.mxu0 0.0
  %529 = vmatprep.subr.mxu0 0.0
  %530 = vmatpush1.msra.mxu0 0.0
  %531 = vmatprep.subr.mxu0 0.0
  %532 = vmatpush1.msra.mxu0 0.0
  %533 = vmatprep.subr.mxu0 0.0
  %534 = vmatpush1.msra.mxu0 0.0
  %535 = vmatprep.subr.mxu0 0.0
  %536 = vmatpush1.msra.mxu0 0.0
  %537 = vmatprep.subr.mxu0 0.0
  %538 = vmatpush1.msra.mxu0 0.0
  %539 = vmatprep.subr.mxu0 0.0
  %540 = vmatpush1.msra.mxu0 0.0
  %541 = vmatprep.subr.mxu0 0.0
  %542 = vmatpush1.msra.mxu0 0.0
  %543 = vmatprep.subr.mxu0 0.0
  %544 = vmatpush1.msra.mxu0 0.0
  %545 = vmatprep.subr.mxu0 0.0
  %546 = vmatpush1.msra.mxu0 0.0
  %547 = vmatprep.subr.mxu0 0.0
  %548 = vmatpush1.msra.mxu0 0.0
  %549 = vmatprep.subr.mxu0 0.0
  %550 = vmatpush1.msra.mxu0 0.0
  %551 = vmatprep.subr.mxu0 0.0
  %552 = vmatpush1.msra.mxu0 0.0
  %553 = vmatprep.subr.mxu0 0.0
  %554 = vmatpush1.msra.mxu0 0.0
  %555 = vmatprep.subr.mxu0 0.0
  %556 = vmatpush1.msra.mxu0 0.0
  %557 = vmatprep.subr.mxu0 0.0
  %558 = vmatpush1.msra.mxu0 0.0
  %559 = vmatprep.subr.mxu0 0.0
  %560 = vmatpush1.msra.mxu0 0.0
  %561 = vmatprep.subr.mxu0 0.0
  %562 = vmatpush1.msra.mxu0 0.0
  %563 = vmatprep.subr.mxu0 0.0
  %564 = vmatpush1.msra.mxu0 0.0
  %565 = vmatprep.subr.mxu0 0.0
  %566 = vmatpush1.msra.mxu0 0.0
  %567 = vmatprep.subr.mxu0 0.0
  %568 = vmatpush1.msra.mxu0 0.0
  %569 = vmatprep.subr.mxu0 0.0
  %570 = vmatpush1.msra.mxu0 0.0
  %571 = vmatprep.subr.mxu0 0.0
  %572 = vmatpush1.msra.mxu0 0.0
  %573 = vmatprep.subr.mxu0 0.0
  %574 = vmatpush1.msra.mxu0 0.0
  %575 = vmatprep.subr.mxu0 0.0
  %576 = vmatpush1.msra.mxu0 0.0
  %577 = vmatprep.subr.mxu0 0.0
  %578 = vmatpush1.msra.mxu0 0.0
  %579 = vmatprep.subr.mxu0 0.0
  %580 = vmatpush1.msra.mxu0 0.0
  %581 = vmatprep.mubr.f32.mxu0 0.0
  %582 = vmatmul.mubr.f32.gmra.mrb[0].mxu0 %v515
  %v583 = vpop.f32.mrb[0].mxu0
  %v584 = vadd.f32 0.0, %v583
  %v585 = vpop.f32.mrb[0].mxu0
  %586 = vdwg.mxu0
  %v587 = vld [vmem:[%s2 + $0x1] sm:$0x1]
  %v588 = vld [vmem:[%s2 + $0x3] sm:$0x1]
  %v589 = vld [vmem:[%s2 + $0x5] sm:$0x1]
  %v590 = vld [vmem:[%s2 + $0x7] sm:$0x1]
  %v591 = vld [vmem:[%s2 + $0x9] sm:$0x1]
  %v592 = vld [vmem:[%s2 + $0xb] sm:$0x1]
  %v593 = vld [vmem:[%s2 + $0xd] sm:$0x1]
  %s595 = vtos %v587
  %v596 = vstv %s595
  %s599 = vtos %v588
  %v600 = vstv %s599
  %s603 = vtos %v589
  %v604 = vstv %s603
  %s607 = vtos %v590
  %v608 = vstv %s607
  %s611 = vtos %v591
  %v612 = vstv %s611
  %s615 = vtos %v592
  %v616 = vstv %s615
  %s619 = vtos %v593
  %v620 = vstv %s619
  %v622 = vmul.f32 %v596, %v584
  %v623 = vmul.f32 %v600, %v584
  %v624 = vmul.f32 %v604, %v584
  %v625 = vmul.f32 %v608, %v584
  %v626 = vmul.f32 %v612, %v584
  %v627 = vmul.f32 %v616, %v584
  %v628 = vmul.f32 %v620, %v584
  %v629 = vadd.f32 %v434, %v622
  %v630 = vadd.f32 %v435, %v623
  %v631 = vadd.f32 %v436, %v624
  %v632 = vadd.f32 %v437, %v625
  %v633 = vadd.f32 %v438, %v626
  %v634 = vadd.f32 %v439, %v627
  %v635 = vadd.f32 %v440, %v628
  %636 = vmatprep.subr.mxu0 0.0
  %637 = vmatpush1.msra.mxu0 %v320
  %638 = vmatprep.subr.mxu0 0.0
  %639 = vmatpush1.msra.mxu0 0.0
  %640 = vmatprep.subr.mxu0 0.0
  %641 = vmatpush1.msra.mxu0 0.0
  %642 = vmatprep.subr.mxu0 0.0
  %643 = vmatpush1.msra.mxu0 0.0
  %644 = vmatprep.subr.mxu0 0.0
  %645 = vmatpush1.msra.mxu0 0.0
  %646 = vmatprep.subr.mxu0 0.0
  %647 = vmatpush1.msra.mxu0 0.0
  %648 = vmatprep.subr.mxu0 0.0
  %649 = vmatpush1.msra.mxu0 0.0
  %650 = vmatprep.subr.mxu0 0.0
  %651 = vmatpush1.msra.mxu0 0.0
  %652 = vmatprep.subr.mxu0 0.0
  %653 = vmatpush1.msra.mxu0 0.0
  %654 = vmatprep.subr.mxu0 0.0
  %655 = vmatpush1.msra.mxu0 0.0
  %656 = vmatprep.subr.mxu0 0.0
  %657 = vmatpush1.msra.mxu0 0.0
  %658 = vmatprep.subr.mxu0 0.0
  %659 = vmatpush1.msra.mxu0 0.0
  %660 = vmatprep.subr.mxu0 0.0
  %661 = vmatpush1.msra.mxu0 0.0
  %662 = vmatprep.subr.mxu0 0.0
  %663 = vmatpush1.msra.mxu0 0.0
  %664 = vmatprep.subr.mxu0 0.0
  %665 = vmatpush1.msra.mxu0 0.0
  %666 = vmatprep.subr.mxu0 0.0
  %667 = vmatpush1.msra.mxu0 0.0
  %668 = vmatprep.subr.mxu0 0.0
  %669 = vmatpush1.msra.mxu0 0.0
  %670 = vmatprep.subr.mxu0 0.0
  %671 = vmatpush1.msra.mxu0 0.0
  %672 = vmatprep.subr.mxu0 0.0
  %673 = vmatpush1.msra.mxu0 0.0
  %674 = vmatprep.subr.mxu0 0.0
  %675 = vmatpush1.msra.mxu0 0.0
  %676 = vmatprep.subr.mxu0 0.0
  %677 = vmatpush1.msra.mxu0 0.0
  %678 = vmatprep.subr.mxu0 0.0
  %679 = vmatpush1.msra.mxu0 0.0
  %680 = vmatprep.subr.mxu0 0.0
  %681 = vmatpush1.msra.mxu0 0.0
  %682 = vmatprep.subr.mxu0 0.0
  %683 = vmatpush1.msra.mxu0 0.0
  %684 = vmatprep.subr.mxu0 0.0
  %685 = vmatpush1.msra.mxu0 0.0
  %686 = vmatprep.subr.mxu0 0.0
  %687 = vmatpush1.msra.mxu0 0.0
  %688 = vmatprep.subr.mxu0 0.0
  %689 = vmatpush1.msra.mxu0 0.0
  %690 = vmatprep.subr.mxu0 0.0
  %691 = vmatpush1.msra.mxu0 0.0
  %692 = vmatprep.subr.mxu0 0.0
  %693 = vmatpush1.msra.mxu0 0.0
  %694 = vmatprep.subr.mxu0 0.0
  %695 = vmatpush1.msra.mxu0 0.0
  %696 = vmatprep.subr.mxu0 0.0
  %697 = vmatpush1.msra.mxu0 0.0
  %698 = vmatprep.subr.mxu0 0.0
  %699 = vmatpush1.msra.mxu0 0.0
  %700 = vmatprep.mubr.f32.mxu0 0.0
  %701 = vmatmul.mubr.f32.gmra.mrb[0].mxu0 %v515
  %v702 = vpop.f32.mrb[0].mxu0
  %v703 = vadd.f32 0.0, %v702
  %v704 = vpop.f32.mrb[0].mxu0
  %705 = vdwg.mxu0
  %706 = vrot.lane.b32.xlu0 %v587, 127
  %v707 = vpop.permute.xlu0 %706
  %708 = vrot.lane.b32.xlu0 %v588, 127
  %v709 = vpop.permute.xlu0 %708
  %710 = vrot.lane.b32.xlu0 %v589, 127
  %v711 = vpop.permute.xlu0 %710
  %712 = vrot.lane.b32.xlu0 %v590, 127
  %v713 = vpop.permute.xlu0 %712
  %714 = vrot.lane.b32.xlu0 %v591, 127
  %v715 = vpop.permute.xlu0 %714
  %716 = vrot.lane.b32.xlu0 %v592, 127
  %v717 = vpop.permute.xlu0 %716
  %718 = vrot.lane.b32.xlu0 %v593, 127
  %v719 = vpop.permute.xlu0 %718
  %s720 = vtos %v707
  %v721 = vstv %s720
  %s723 = vtos %v709
  %v724 = vstv %s723
  %s726 = vtos %v711
  %v727 = vstv %s726
  %s729 = vtos %v713
  %v730 = vstv %s729
  %s732 = vtos %v715
  %v733 = vstv %s732
  %s735 = vtos %v717
  %v736 = vstv %s735
  %s738 = vtos %v719
  %v739 = vstv %s738
  %v741 = vmul.f32 %v721, %v703
  %v742 = vmul.f32 %v724, %v703
  %v743 = vmul.f32 %v727, %v703
  %v744 = vmul.f32 %v730, %v703
  %v745 = vmul.f32 %v733, %v703
  %v746 = vmul.f32 %v736, %v703
  %v747 = vmul.f32 %v739, %v703
  %v748 = vadd.f32 %v629, %v741
  %v749 = vadd.f32 %v630, %v742
  %v750 = vadd.f32 %v631, %v743
  %v751 = vadd.f32 %v632, %v744
  %v752 = vadd.f32 %v633, %v745
  %v753 = vadd.f32 %v634, %v746
  %v754 = vadd.f32 %v635, %v747
  %vm755 = vcmask 36864
  %756 = vst.msk [vmem:[%s4] sm:$0x1f] %vm755, %v748
  %757 = vst.msk [vmem:[%s4 + $0x8] sm:$0x1f] %vm755, %v749
  %758 = vst.msk [vmem:[%s4 + $0x10] sm:$0x1f] %vm755, %v750
  %759 = vst.msk [vmem:[%s4 + $0x18] sm:$0x1f] %vm755, %v751
  %760 = vst.msk [vmem:[%s4 + $0x20] sm:$0x1f] %vm755, %v752
  %761 = vst.msk [vmem:[%s4 + $0x28] sm:$0x1f] %vm755, %v753
  %762 = vst.msk [vmem:[%s4 + $0x30] sm:$0x1f] %vm755, %v754
  // Predicated region
  $region18: #{model_forward.1} parent=0 // pred_check
    _
  $region19: #{model_forward.1} parent=0 // pred_check_branch
    %764 = sbr.rel (0) target = $region21
  $region20: #{model_forward.1} parent=0 // pred_region
    _
  $region21: #{model_forward.1} parent=0 // pred_fallthru
    _
  // Predicated region
  $region22: #{model_forward.1} parent=0 // pred_check
    _
  $region23: #{model_forward.1} parent=0 // pred_check_branch
    %766 = sbr.rel (0) target = $region25
  $region24: #{model_forward.1} parent=0 // pred_region
    _
  $region25: #{model_forward.1} parent=0 // pred_fallthru
    _

</llo_original>
